<compile_context>
chip_gen: v7x
topology: tpu7x:2x2x1
jax: 0.10.0
libtpu: 0.0.40
codegen_flags: <defaults>
</compile_context>

<pallas_src>
import functools

import jax
import jax.numpy as jnp
from jax.experimental import pallas as pl
from jax.experimental.pallas import tpu as pltpu

LN_EPS = 1e-5
INV_SQRT2 = 0.7071067811865476


def _round_up(x, m):
    return ((x + m - 1) // m) * m


def _mlm_head_kernel(x_ref, wt_ref, bt_ref, g_ref, beta_ref, et_ref, db_ref,
                     out_ref, h_scratch):
    """Grid = (token_tiles, vocab_tiles), vocab innermost.

    transform + gelu + LayerNorm is computed once per token tile (at vocab
    tile 0) into a bf16 VMEM scratch, then reused for every vocab tile of the
    large decoder matmul.
    """
    j = pl.program_id(1)

    @pl.when(j == 0)
    def _():
        x = x_ref[...].astype(jnp.float32)
        # transform: x @ W_t (already pre-transposed to (H_in, H_out)) + b_t
        h = jnp.dot(x, wt_ref[...],
                    preferred_element_type=jnp.float32) + bt_ref[...]
        # exact gelu: 0.5 * x * (1 + erf(x / sqrt(2)))
        h = 0.5 * h * (1.0 + jax.lax.erf(h * INV_SQRT2))
        # LayerNorm over the hidden (last) axis
        mu = jnp.mean(h, axis=-1, keepdims=True)
        var = jnp.mean((h - mu) * (h - mu), axis=-1, keepdims=True)
        hn = (h - mu) * jax.lax.rsqrt(var + LN_EPS)
        h_scratch[...] = (hn * g_ref[...] + beta_ref[...]).astype(h_scratch.dtype)

    # decoder: h_norm(bf16) @ E_T(bf16, (H, tn)) with f32 accumulation + bias
    logits = jnp.dot(h_scratch[...], et_ref[...],
                     preferred_element_type=jnp.float32) + db_ref[...]
    out_ref[...] = logits.astype(out_ref.dtype)


@functools.partial(jax.jit, static_argnames=("tm", "tn"))
def bert_only_mlm_head(sequence_output, params, *, tm=256, tn=1024):
    """sequence_output: (B, S, H) float32. Returns (B, S, V) float32 logits."""
    B, S, H = sequence_output.shape
    V = params["decoder_weight"].shape[0]
    T = B * S

    # Clamp tile sizes to the (rounded-up) problem size so small demo shapes
    # don't get padded to the full default tiles.
    tm = min(tm, _round_up(T, 8))
    tn = min(tn, _round_up(V, 128))
    Tp = _round_up(T, tm)
    Vp = _round_up(V, tn)

    x2d = sequence_output.reshape(T, H).astype(jnp.float32)
    # Pre-transpose weights once (amortized over the whole grid).
    wt = params["transform_w"].T.astype(jnp.float32)            # (H_in, H_out)
    et = params["decoder_weight"].T.astype(jnp.bfloat16)        # (H, V) bf16
    bt = params["transform_b"].reshape(1, H).astype(jnp.float32)
    gamma = params["ln_gamma"].reshape(1, H).astype(jnp.float32)
    beta = params["ln_beta"].reshape(1, H).astype(jnp.float32)
    db = params["decoder_bias"].reshape(1, V).astype(jnp.float32)

    # Pad ragged token / vocab dims to tile multiples (sliced off afterwards).
    if Tp != T:
        x2d = jnp.pad(x2d, ((0, Tp - T), (0, 0)))
    if Vp != V:
        et = jnp.pad(et, ((0, 0), (0, Vp - V)))
        db = jnp.pad(db, ((0, 0), (0, Vp - V)))

    grid = (Tp // tm, Vp // tn)

    out2d = pl.pallas_call(
        _mlm_head_kernel,
        out_shape=jax.ShapeDtypeStruct((Tp, Vp), jnp.float32),
        grid_spec=pltpu.PrefetchScalarGridSpec(
            num_scalar_prefetch=0,
            grid=grid,
            in_specs=[
                pl.BlockSpec((tm, H), lambda i, j: (i, 0)),   # x tile (f32)
                pl.BlockSpec((H, H), lambda i, j: (0, 0)),    # transform W^T
                pl.BlockSpec((1, H), lambda i, j: (0, 0)),    # transform b
                pl.BlockSpec((1, H), lambda i, j: (0, 0)),    # LN gamma
                pl.BlockSpec((1, H), lambda i, j: (0, 0)),    # LN beta
                pl.BlockSpec((H, tn), lambda i, j: (0, j)),   # E^T tile (bf16)
                pl.BlockSpec((1, tn), lambda i, j: (0, j)),   # decoder bias
            ],
            out_specs=pl.BlockSpec((tm, tn), lambda i, j: (i, j)),
            scratch_shapes=[pltpu.VMEM((tm, H), jnp.bfloat16)],
        ),
        compiler_params=pltpu.CompilerParams(
            dimension_semantics=("parallel", "arbitrary")),
    )(x2d, wt, bt, gamma, beta, et, db)

    out2d = out2d[:T, :V]
    return out2d.reshape(B, S, V)


def _reference(sequence_output, params):
    """Pure-JAX f32 reference matching the PyTorch forward."""
    x = sequence_output
    h = x @ params["transform_w"].T + params["transform_b"]
    h = jax.nn.gelu(h, approximate=False)
    mu = jnp.mean(h, axis=-1, keepdims=True)
    var = jnp.mean((h - mu) ** 2, axis=-1, keepdims=True)
    h = (h - mu) / jnp.sqrt(var + LN_EPS)
    h = h * params["ln_gamma"] + params["ln_beta"]
    return h @ params["decoder_weight"].T + params["decoder_bias"]


if __name__ == "__main__":
    # Small shapes consistent with the module: batch=2, seq=8, hidden=128,
    # vocab=512.
    B, S, H, V = 2, 8, 128, 512

    key = jax.random.PRNGKey(0)
    ks = jax.random.split(key, 6)
    params = {
        "transform_w": 0.02 * jax.random.normal(ks[0], (H, H), jnp.float32),
        "transform_b": 0.02 * jax.random.normal(ks[1], (H,), jnp.float32),
        "ln_gamma": jnp.ones((H,), jnp.float32),
        "ln_beta": jnp.zeros((H,), jnp.float32),
        "decoder_weight": 0.02 * jax.random.normal(ks[2], (V, H), jnp.float32),
        "decoder_bias": 0.02 * jax.random.normal(ks[3], (V,), jnp.float32),
    }
    x = jax.random.normal(ks[4], (B, S, H), jnp.float32)

    out = bert_only_mlm_head(x, params)
    jax.block_until_ready(out)

    ref = _reference(x, params)
    assert out.shape == (B, S, V), out.shape
    # Decoder matmul operands are bf16 (f32 accumulation): allow small drift
    # vs the pure-f32 reference.
    max_err = float(jnp.max(jnp.abs(out - ref)))
    assert jnp.allclose(out, ref, atol=5e-2, rtol=5e-2), max_err

    # TODO(synk): masked_positions gather path of BertLMPredictionHead is not
    # implemented (None path only), matching the default forward.
    print("KERNEL_OK")
</pallas_src>

<mosaic_0001>
module attributes {stable_mosaic.version = 11 : i64} {
  func.func @_mlm_head_kernel(%arg0: i32, %arg1: i32, %arg2: memref<16x128xf32, #tpu.memory_space<vmem>>, %arg3: memref<128x128xf32, #tpu.memory_space<vmem>>, %arg4: memref<1x128xf32, #tpu.memory_space<vmem>>, %arg5: memref<1x128xf32, #tpu.memory_space<vmem>>, %arg6: memref<1x128xf32, #tpu.memory_space<vmem>>, %arg7: memref<128x512xbf16, #tpu.memory_space<vmem>>, %arg8: memref<1x512xf32, #tpu.memory_space<vmem>>, %arg9: memref<16x512xf32, #tpu.memory_space<vmem>>, %arg10: memref<16x128xbf16, #tpu.memory_space<vmem>>) attributes {dimension_semantics = [#tpu.dimension_semantics<parallel>, #tpu.dimension_semantics<arbitrary>], iteration_bounds = array<i64: 1, 1>, scalar_prefetch = 0 : i64, scratch_operands = 1 : i64, tpu.core_type = #tpu.core_type<tc>, window_params = [{transform_indices = @transform_0, window_bounds = array<i64: 16, 128>}, {pipeline_mode = #tpu.pipeline_mode<synchronous>, transform_indices = @transform_1, window_bounds = array<i64: 128, 128>}, {pipeline_mode = #tpu.pipeline_mode<synchronous>, transform_indices = @transform_2, window_bounds = array<i64: 1, 128>}, {pipeline_mode = #tpu.pipeline_mode<synchronous>, transform_indices = @transform_3, window_bounds = array<i64: 1, 128>}, {pipeline_mode = #tpu.pipeline_mode<synchronous>, transform_indices = @transform_4, window_bounds = array<i64: 1, 128>}, {transform_indices = @transform_5, window_bounds = array<i64: 128, 512>}, {transform_indices = @transform_6, window_bounds = array<i64: 1, 512>}, {transform_indices = @transform_7, window_bounds = array<i64: 16, 512>}]} {
    %c0_i32 = arith.constant 0 : i32
    %0 = arith.cmpi eq, %arg1, %c0_i32 : i32
    %1 = arith.extui %0 : i1 to i32
    %c0_i32_0 = arith.constant 0 : i32
    %2 = arith.cmpi ne, %1, %c0_i32_0 : i32
    scf.if %2 {
      %c0_8 = arith.constant 0 : index
      %c0_9 = arith.constant 0 : index
      %10 = vector.load %arg2[%c0_8, %c0_9] : memref<16x128xf32, #tpu.memory_space<vmem>>, vector<16x128xf32>
      %c0_10 = arith.constant 0 : index
      %c0_11 = arith.constant 0 : index
      %11 = vector.load %arg3[%c0_10, %c0_11] : memref<128x128xf32, #tpu.memory_space<vmem>>, vector<128x128xf32>
      %cst_12 = arith.constant dense<0.000000e+00> : vector<16x128xf32>
      %12 = tpu.matmul %10, %11, %cst_12 {dimension_numbers = #tpu.dot_dimension_numbers<[1], [0], [0], [1], [0, 0, 1, 1], [], []>} : vector<16x128xf32>, vector<128x128xf32>, vector<16x128xf32> -> vector<16x128xf32>
      %c0_13 = arith.constant 0 : index
      %c0_14 = arith.constant 0 : index
      %13 = vector.load %arg4[%c0_13, %c0_14] : memref<1x128xf32, #tpu.memory_space<vmem>>, vector<1x128xf32>
      %14 = vector.broadcast %13 : vector<1x128xf32> to vector<16x128xf32>
      %15 = arith.addf %12, %14 : vector<16x128xf32>
      %cst_15 = arith.constant 5.000000e-01 : f32
      %16 = vector.broadcast %cst_15 : f32 to vector<16x128xf32>
      %17 = arith.mulf %16, %15 : vector<16x128xf32>
      %cst_16 = arith.constant 0.707106769 : f32
      %18 = vector.broadcast %cst_16 : f32 to vector<16x128xf32>
      %19 = arith.mulf %15, %18 : vector<16x128xf32>
      %20 = math.erf %19 : vector<16x128xf32>
      %cst_17 = arith.constant 1.000000e+00 : f32
      %21 = vector.broadcast %cst_17 : f32 to vector<16x128xf32>
      %22 = arith.addf %21, %20 : vector<16x128xf32>
      %23 = arith.mulf %17, %22 : vector<16x128xf32>
      %cst_18 = arith.constant dense<0.000000e+00> : vector<16xf32>
      %24 = vector.multi_reduction <add>, %23, %cst_18 [1] : vector<16x128xf32> to vector<16xf32>
      %25 = vector.shape_cast %24 : vector<16xf32> to vector<16x1xf32>
      %cst_19 = arith.constant 1.280000e+02 : f32
      %26 = vector.broadcast %cst_19 : f32 to vector<16x1xf32>
      %27 = arith.divf %25, %26 : vector<16x1xf32>
      %28 = vector.broadcast %27 : vector<16x1xf32> to vector<16x128xf32>
      %29 = arith.subf %23, %28 : vector<16x128xf32>
      %30 = vector.broadcast %27 : vector<16x1xf32> to vector<16x128xf32>
      %31 = arith.subf %23, %30 : vector<16x128xf32>
      %32 = arith.mulf %29, %31 : vector<16x128xf32>
      %cst_20 = arith.constant dense<0.000000e+00> : vector<16xf32>
      %33 = vector.multi_reduction <add>, %32, %cst_20 [1] : vector<16x128xf32> to vector<16xf32>
      %34 = vector.shape_cast %33 : vector<16xf32> to vector<16x1xf32>
      %cst_21 = arith.constant 1.280000e+02 : f32
      %35 = vector.broadcast %cst_21 : f32 to vector<16x1xf32>
      %36 = arith.divf %34, %35 : vector<16x1xf32>
      %37 = vector.broadcast %27 : vector<16x1xf32> to vector<16x128xf32>
      %38 = arith.subf %23, %37 : vector<16x128xf32>
      %cst_22 = arith.constant 9.99999974E-6 : f32
      %39 = vector.broadcast %cst_22 : f32 to vector<16x1xf32>
      %40 = arith.addf %36, %39 : vector<16x1xf32>
      %41 = math.rsqrt %40 : vector<16x1xf32>
      %42 = vector.broadcast %41 : vector<16x1xf32> to vector<16x128xf32>
      %43 = arith.mulf %38, %42 : vector<16x128xf32>
      %c0_23 = arith.constant 0 : index
      %c0_24 = arith.constant 0 : index
      %44 = vector.load %arg5[%c0_23, %c0_24] : memref<1x128xf32, #tpu.memory_space<vmem>>, vector<1x128xf32>
      %45 = vector.broadcast %44 : vector<1x128xf32> to vector<16x128xf32>
      %46 = arith.mulf %43, %45 : vector<16x128xf32>
      %c0_25 = arith.constant 0 : index
      %c0_26 = arith.constant 0 : index
      %47 = vector.load %arg6[%c0_25, %c0_26] : memref<1x128xf32, #tpu.memory_space<vmem>>, vector<1x128xf32>
      %48 = vector.broadcast %47 : vector<1x128xf32> to vector<16x128xf32>
      %49 = arith.addf %46, %48 : vector<16x128xf32>
      %50 = arith.truncf %49 : vector<16x128xf32> to vector<16x128xbf16>
      %c0_27 = arith.constant 0 : index
      %c0_28 = arith.constant 0 : index
      %51 = vector.load %arg10[%c0_27, %c0_28] : memref<16x128xbf16, #tpu.memory_space<vmem>>, vector<16x128xbf16>
      tpu.vector_store %arg10[%c0_27, %c0_28], %50 {strides = array<i32>} : memref<16x128xbf16, #tpu.memory_space<vmem>>, vector<16x128xbf16>,
    } else {
    }
    %c0 = arith.constant 0 : index
    %c0_1 = arith.constant 0 : index
    %3 = vector.load %arg10[%c0, %c0_1] : memref<16x128xbf16, #tpu.memory_space<vmem>>, vector<16x128xbf16>
    %c0_2 = arith.constant 0 : index
    %c0_3 = arith.constant 0 : index
    %4 = vector.load %arg7[%c0_2, %c0_3] : memref<128x512xbf16, #tpu.memory_space<vmem>>, vector<128x512xbf16>
    %cst = arith.constant dense<0.000000e+00> : vector<16x512xf32>
    %5 = tpu.matmul %3, %4, %cst {dimension_numbers = #tpu.dot_dimension_numbers<[1], [0], [0], [1], [0, 0, 1, 1], [], []>} : vector<16x128xbf16>, vector<128x512xbf16>, vector<16x512xf32> -> vector<16x512xf32>
    %c0_4 = arith.constant 0 : index
    %c0_5 = arith.constant 0 : index
    %6 = vector.load %arg8[%c0_4, %c0_5] : memref<1x512xf32, #tpu.memory_space<vmem>>, vector<1x512xf32>
    %7 = vector.broadcast %6 : vector<1x512xf32> to vector<16x512xf32>
    %8 = arith.addf %5, %7 : vector<16x512xf32>
    %c0_6 = arith.constant 0 : index
    %c0_7 = arith.constant 0 : index
    %9 = vector.load %arg9[%c0_6, %c0_7] : memref<16x512xf32, #tpu.memory_space<vmem>>, vector<16x512xf32>
    tpu.vector_store %arg9[%c0_6, %c0_7], %8 {strides = array<i32>} : memref<16x512xf32, #tpu.memory_space<vmem>>, vector<16x512xf32>,
    return
  }
  func.func @transform_0(%arg0: i32, %arg1: i32) -> (i32, i32) {
    %c0_i32 = arith.constant 0 : i32
    %c0_i32_0 = arith.constant 0 : i32
    return %arg0, %c0_i32 : i32, i32
  }
  func.func @transform_1(%arg0: i32, %arg1: i32) -> (i32, i32) {
    %c0_i32 = arith.constant 0 : i32
    %c0_i32_0 = arith.constant 0 : i32
    %c0_i32_1 = arith.constant 0 : i32
    return %c0_i32, %c0_i32_0 : i32, i32
  }
  func.func @transform_2(%arg0: i32, %arg1: i32) -> (i32, i32) {
    %c0_i32 = arith.constant 0 : i32
    %c0_i32_0 = arith.constant 0 : i32
    %c0_i32_1 = arith.constant 0 : i32
    return %c0_i32, %c0_i32_0 : i32, i32
  }
  func.func @transform_3(%arg0: i32, %arg1: i32) -> (i32, i32) {
    %c0_i32 = arith.constant 0 : i32
    %c0_i32_0 = arith.constant 0 : i32
    %c0_i32_1 = arith.constant 0 : i32
    return %c0_i32, %c0_i32_0 : i32, i32
  }
  func.func @transform_4(%arg0: i32, %arg1: i32) -> (i32, i32) {
    %c0_i32 = arith.constant 0 : i32
    %c0_i32_0 = arith.constant 0 : i32
    %c0_i32_1 = arith.constant 0 : i32
    return %c0_i32, %c0_i32_0 : i32, i32
  }
  func.func @transform_5(%arg0: i32, %arg1: i32) -> (i32, i32) {
    %c0_i32 = arith.constant 0 : i32
    %c0_i32_0 = arith.constant 0 : i32
    return %c0_i32, %arg1 : i32, i32
  }
  func.func @transform_6(%arg0: i32, %arg1: i32) -> (i32, i32) {
    %c0_i32 = arith.constant 0 : i32
    %c0_i32_0 = arith.constant 0 : i32
    return %c0_i32, %arg1 : i32, i32
  }
  func.func @transform_7(%arg0: i32, %arg1: i32) -> (i32, i32) {
    %c0_i32 = arith.constant 0 : i32
    return %arg0, %arg1 : i32, i32
  }
}

</mosaic_0001>

<llo_original>
// kernel: bert_only_mlm_head.1
$region0: #{bert_only_mlm_head.1}
  #allocation0 [shape = 'u32[]', space=smem, size = 0x4, offset = 0x4, fixed_abs, tag = 'smem constant byte address 0x4 - core index']
  #allocation1 [shape = 'u32[144,128]{1,0:T(1,128)}', space=vmem, size = 0x12000, scoped, tag = 'internal scratch']
  #allocation2 [shape = 'bf16[16,128]{1,0:T(16,128)(2,1)}', space=vmem, size = 0x1000, scoped, tag = 'scratch operand']
  %s0 = inlined_call_operand.vmem [shape: f32[16,128], index: 0, kind: input, shape index: {}]
  %s1 = inlined_call_operand.vmem [shape: f32[128,128], index: 1, kind: input, shape index: {}]
  %s2 = inlined_call_operand.vmem [shape: f32[1,128], index: 2, kind: input, shape index: {}]
  %s3 = inlined_call_operand.vmem [shape: f32[1,128], index: 3, kind: input, shape index: {}]
  %s4 = inlined_call_operand.vmem [shape: f32[1,128], index: 4, kind: input, shape index: {}]
  %s5 = inlined_call_operand.vmem [shape: bf16[128,512], index: 5, kind: input, shape index: {}]
  %s6 = inlined_call_operand.vmem [shape: f32[1,512], index: 6, kind: input, shape index: {}]
  %s7 = inlined_call_operand.hbm [shape: f32[16,512], index: 7, kind: output, shape index: {}]
  %s8 = sld [smem:[#allocation0]]
  $region42: #{bert_only_mlm_head.1} parent=0
    _
  %s10 = ssub.s32 1, %s8
  %s11 = scalar_select 0, %s10, %s8
  $region1: #{bert_only_mlm_head.1} parent=0
    #allocation3 [shape = 'u8[32768]{0}', space=vmem, size = 0x8000, scoped, tag = 'output window, operand 0, single buffered']
    #allocation4 [shape = 's32[1]{0}', space=sflag, size = 0x4, scoped, tag = 'scoped memory for bert_only_mlm_head.1']
    %12 = vsyncpa [#allocation4], 0
    // Predicated region
    $region2: #{bert_only_mlm_head.1} parent=1 // pred_check
      _
    $region3: #{bert_only_mlm_head.1} parent=1 // pred_check_branch
      %14 = sbr.rel (0) target = $region5
    $region4: #{bert_only_mlm_head.1} parent=1 // pred_region
      _
    $region5: #{bert_only_mlm_head.1} parent=1 // pred_fallthru
      _
    // Predicated region
    $region6: #{bert_only_mlm_head.1} parent=1 // pred_check
      _
    $region7: #{bert_only_mlm_head.1} parent=1 // pred_check_branch
      %16 = sbr.rel (0) target = $region9
    $region8: #{bert_only_mlm_head.1} parent=1 // pred_region
      _
    $region9: #{bert_only_mlm_head.1} parent=1 // pred_fallthru
      _
    // Predicated region
    $region10: #{bert_only_mlm_head.1} parent=1 // pred_check
      _
    $region11: #{bert_only_mlm_head.1} parent=1 // pred_check_branch
      %18 = sbr.rel (0) target = $region13
    $region12: #{bert_only_mlm_head.1} parent=1 // pred_region
      _
    $region13: #{bert_only_mlm_head.1} parent=1 // pred_fallthru
      _
    // Predicated region
    $region14: #{bert_only_mlm_head.1} parent=1 // pred_check
      _
    $region15: #{bert_only_mlm_head.1} parent=1 // pred_check_branch
      %20 = sbr.rel (0) target = $region17
    $region16: #{bert_only_mlm_head.1} parent=1 // pred_region
      _
    $region17: #{bert_only_mlm_head.1} parent=1 // pred_fallthru
      _
    // Predicated region
    $region18: #{bert_only_mlm_head.1} parent=1 // pred_check
      _
    $region19: #{bert_only_mlm_head.1} parent=1 // pred_check_branch
      %22 = sbr.rel (0) target = $region21
    $region20: #{bert_only_mlm_head.1} parent=1 // pred_region
      _
    $region21: #{bert_only_mlm_head.1} parent=1 // pred_fallthru
      _
    // Predicated region
    $region22: #{bert_only_mlm_head.1} parent=1 // pred_check
      _
    $region23: #{bert_only_mlm_head.1} parent=1 // pred_check_branch
      %24 = sbr.rel (0) target = $region25
    $region24: #{bert_only_mlm_head.1} parent=1 // pred_region
      _
    $region25: #{bert_only_mlm_head.1} parent=1 // pred_fallthru
      _
    // Predicated region
    $region26: #{bert_only_mlm_head.1} parent=1 // pred_check
      _
    $region27: #{bert_only_mlm_head.1} parent=1 // pred_check_branch
      %26 = sbr.rel (0) target = $region29
    $region28: #{bert_only_mlm_head.1} parent=1 // pred_region
      _
    $region29: #{bert_only_mlm_head.1} parent=1 // pred_fallthru
      _
    %p28 = scmp.eq.s32.totalorder 0, 0
    // Predicated region
    $region30: #{bert_only_mlm_head.1} parent=1 // pred_check
      %p29 = pneg %p28
    $region31: #{bert_only_mlm_head.1} parent=1 // pred_check_branch
      %31 = sbr.rel (%p29) target = $region33
    $region32: #{bert_only_mlm_head.1} parent=1 // pred_region
      %v32 = vld [vmem:[%s0] sm:$0xff]
      %v33 = vld [vmem:[%s0 + $0x8] sm:$0xff]
      %v34 = vld [vmem:[%s1] sm:$0xff]
      %v35 = vld [vmem:[%s1 + $0x8] sm:$0xff]
      %v36 = vld [vmem:[%s1 + $0x10] sm:$0xff]
      %v37 = vld [vmem:[%s1 + $0x18] sm:$0xff]
      %v38 = vld [vmem:[%s1 + $0x20] sm:$0xff]
      %v39 = vld [vmem:[%s1 + $0x28] sm:$0xff]
      %v40 = vld [vmem:[%s1 + $0x30] sm:$0xff]
      %v41 = vld [vmem:[%s1 + $0x38] sm:$0xff]
      %v42 = vld [vmem:[%s1 + $0x40] sm:$0xff]
      %v43 = vld [vmem:[%s1 + $0x48] sm:$0xff]
      %v44 = vld [vmem:[%s1 + $0x50] sm:$0xff]
      %v45 = vld [vmem:[%s1 + $0x58] sm:$0xff]
      %v46 = vld [vmem:[%s1 + $0x60] sm:$0xff]
      %v47 = vld [vmem:[%s1 + $0x68] sm:$0xff]
      %v48 = vld [vmem:[%s1 + $0x70] sm:$0xff]
      %v49 = vld [vmem:[%s1 + $0x78] sm:$0xff]
      %v50 = vld [vmem:[%s2] sm:$0x1]
      %v52 = vlaneseq
      %v53 = vshrl.u32 %v52, 7
      %v54 = vsub.s32 0, %v53
      %v55 = vrot.slane %v50, %v54
      %57 = vmatprep.subr.mxu0 0.0
      %58 = vmatpush1.msra.mxu0 %v34
      %59 = vmatprep.subr.mxu0 0.0
      %60 = vmatpush1.msra.mxu0 %v35
      %61 = vmatprep.subr.mxu0 0.0
      %62 = vmatpush1.msra.mxu0 %v36
      %63 = vmatprep.subr.mxu0 0.0
      %64 = vmatpush1.msra.mxu0 %v37
      %65 = vmatprep.subr.mxu0 0.0
      %66 = vmatpush1.msra.mxu0 %v38
      %67 = vmatprep.subr.mxu0 0.0
      %68 = vmatpush1.msra.mxu0 %v39
      %69 = vmatprep.subr.mxu0 0.0
      %70 = vmatpush1.msra.mxu0 %v40
      %71 = vmatprep.subr.mxu0 0.0
      %72 = vmatpush1.msra.mxu0 %v41
      %73 = vmatprep.subr.mxu0 0.0
      %74 = vmatpush1.msra.mxu0 %v42
      %75 = vmatprep.subr.mxu0 0.0
      %76 = vmatpush1.msra.mxu0 %v43
      %77 = vmatprep.subr.mxu0 0.0
      %78 = vmatpush1.msra.mxu0 %v44
      %79 = vmatprep.subr.mxu0 0.0
      %80 = vmatpush1.msra.mxu0 %v45
      %81 = vmatprep.subr.mxu0 0.0
      %82 = vmatpush1.msra.mxu0 %v46
      %83 = vmatprep.subr.mxu0 0.0
      %84 = vmatpush1.msra.mxu0 %v47
      %85 = vmatprep.subr.mxu0 0.0
      %86 = vmatpush1.msra.mxu0 %v48
      %87 = vmatprep.subr.mxu0 0.0
      %88 = vmatpush1.msra.mxu0 %v49
      %89 = vmatprep.subr.mxu0 0.0
      %90 = vmatpush1.msra.mxu0 0.0
      %91 = vmatprep.subr.mxu0 0.0
      %92 = vmatpush1.msra.mxu0 0.0
      %93 = vmatprep.subr.mxu0 0.0
      %94 = vmatpush1.msra.mxu0 0.0
      %95 = vmatprep.subr.mxu0 0.0
      %96 = vmatpush1.msra.mxu0 0.0
      %97 = vmatprep.subr.mxu0 0.0
      %98 = vmatpush1.msra.mxu0 0.0
      %99 = vmatprep.subr.mxu0 0.0
      %100 = vmatpush1.msra.mxu0 0.0
      %101 = vmatprep.subr.mxu0 0.0
      %102 = vmatpush1.msra.mxu0 0.0
      %103 = vmatprep.subr.mxu0 0.0
      %104 = vmatpush1.msra.mxu0 0.0
      %105 = vmatprep.subr.mxu0 0.0
      %106 = vmatpush1.msra.mxu0 0.0
      %107 = vmatprep.subr.mxu0 0.0
      %108 = vmatpush1.msra.mxu0 0.0
      %109 = vmatprep.subr.mxu0 0.0
      %110 = vmatpush1.msra.mxu0 0.0
      %111 = vmatprep.subr.mxu0 0.0
      %112 = vmatpush1.msra.mxu0 0.0
      %113 = vmatprep.subr.mxu0 0.0
      %114 = vmatpush1.msra.mxu0 0.0
      %115 = vmatprep.subr.mxu0 0.0
      %116 = vmatpush1.msra.mxu0 0.0
      %117 = vmatprep.subr.mxu0 0.0
      %118 = vmatpush1.msra.mxu0 0.0
      %119 = vmatprep.subr.mxu0 0.0
      %120 = vmatpush1.msra.mxu0 0.0
      %121 = vmatprep.mubr.f32.mxu0 0.0
      %122 = vmatmul.mubr.f32.gmra.mrb[0].mxu0 %v32
      %v123 = vpop.f32.mrb[0].mxu0
      %v124 = vadd.f32 %v55, %v123
      %v125 = vpop.f32.mrb[0].mxu0
      %126 = vmatprep.mubr.f32.mxu0 0.0
      %127 = vmatmul.mubr.f32.gmra.mrb[0].mxu0 %v33
      %v128 = vpop.f32.mrb[0].mxu0
      %v129 = vadd.f32 %v55, %v128
      %v130 = vpop.f32.mrb[0].mxu0
      %131 = vdwg.mxu0
      %v132 = vmul.f32 %v124, 0.5
      %v133 = vmul.f32 %v129, 0.5
      %v134 = vmul.f32 %v124, 0.70710677
      %v135 = vmul.f32 %v129, 0.70710677
      %v136 = verf.f32.pop %v134
      %v137 = verf.f32.pop %v135
      %v138 = vadd.f32 %v136, 1.0
      %v139 = vadd.f32 %v137, 1.0
      %v140 = vmul.f32 %v132, %v138
      %v141 = vmul.f32 %v133, %v139
      %142 = vadd.xlane.f32.xlu0 %v140
      %v143 = vpop.xlane.xlu0 %142
      %144 = vadd.xlane.f32.xlu0 %v141
      %v145 = vpop.xlane.xlu0 %144
      %v146 = vrcp.pop 128.0
      %v147 = vmul.f32 %v143, %v146
      %v148 = vmul.f32 %v145, %v146
      %v149 = vsub.f32 %v140, %v147
      %v150 = vsub.f32 %v141, %v148
      %v151 = vmul.f32 %v149, %v149
      %v152 = vmul.f32 %v150, %v150
      %153 = vadd.xlane.f32.xlu0 %v151
      %v154 = vpop.xlane.xlu0 %153
      %155 = vadd.xlane.f32.xlu0 %v152
      %v156 = vpop.xlane.xlu0 %155
      %v157 = vmul.f32 %v154, %v146
      %v158 = vmul.f32 %v156, %v146
      %v159 = vadd.f32 %v157, 1e-05
      %v160 = vadd.f32 %v158, 1e-05
      %v161 = vrsqrt.pop %v159
      %v162 = vrsqrt.pop %v160
      %v163 = vmul.f32 %v149, %v161
      %v164 = vmul.f32 %v150, %v162
      %v165 = vld [vmem:[%s3] sm:$0x1]
      %v167 = vlaneseq
      %v168 = vshrl.u32 %v167, 7
      %v169 = vsub.s32 0, %v168
      %v170 = vrot.slane %v165, %v169
      %v172 = vmul.f32 %v163, %v170
      %v173 = vmul.f32 %v164, %v170
      %v174 = vld [vmem:[%s4] sm:$0x1]
      %v176 = vlaneseq
      %v177 = vshrl.u32 %v176, 7
      %v178 = vsub.s32 0, %v177
      %v179 = vrot.slane %v174, %v178
      %v181 = vadd.f32 %v172, %v179
      %v182 = vadd.f32 %v173, %v179
      %v183 = vpack.c.bf16 %v182, %v181
      %184 = vst [vmem:[#allocation2] sm:$0xff] %v183
    $region33: #{bert_only_mlm_head.1} parent=1 // pred_fallthru
      _
    %v185 = vld [vmem:[#allocation2] sm:$0xff]
    %v186 = vld [vmem:[%s5] sm:$0xff]
    %v187 = vld [vmem:[%s5 + $0x8] sm:$0xff]
    %v188 = vld [vmem:[%s5 + $0x10] sm:$0xff]
    %v189 = vld [vmem:[%s5 + $0x18] sm:$0xff]
    %v190 = vld [vmem:[%s5 + $0x20] sm:$0xff]
    %v191 = vld [vmem:[%s5 + $0x28] sm:$0xff]
    %v192 = vld [vmem:[%s5 + $0x30] sm:$0xff]
    %v193 = vld [vmem:[%s5 + $0x38] sm:$0xff]
    %v194 = vld [vmem:[%s5 + $0x40] sm:$0xff]
    %v195 = vld [vmem:[%s5 + $0x48] sm:$0xff]
    %v196 = vld [vmem:[%s5 + $0x50] sm:$0xff]
    %v197 = vld [vmem:[%s5 + $0x58] sm:$0xff]
    %v198 = vld [vmem:[%s5 + $0x60] sm:$0xff]
    %v199 = vld [vmem:[%s5 + $0x68] sm:$0xff]
    %v200 = vld [vmem:[%s5 + $0x70] sm:$0xff]
    %v201 = vld [vmem:[%s5 + $0x78] sm:$0xff]
    %v202 = vld [vmem:[%s5 + $0x80] sm:$0xff]
    %v203 = vld [vmem:[%s5 + $0x88] sm:$0xff]
    %v204 = vld [vmem:[%s5 + $0x90] sm:$0xff]
    %v205 = vld [vmem:[%s5 + $0x98] sm:$0xff]
    %v206 = vld [vmem:[%s5 + $0xa0] sm:$0xff]
    %v207 = vld [vmem:[%s5 + $0xa8] sm:$0xff]
    %v208 = vld [vmem:[%s5 + $0xb0] sm:$0xff]
    %v209 = vld [vmem:[%s5 + $0xb8] sm:$0xff]
    %v210 = vld [vmem:[%s5 + $0xc0] sm:$0xff]
    %v211 = vld [vmem:[%s5 + $0xc8] sm:$0xff]
    %v212 = vld [vmem:[%s5 + $0xd0] sm:$0xff]
    %v213 = vld [vmem:[%s5 + $0xd8] sm:$0xff]
    %v214 = vld [vmem:[%s5 + $0xe0] sm:$0xff]
    %v215 = vld [vmem:[%s5 + $0xe8] sm:$0xff]
    %v216 = vld [vmem:[%s5 + $0xf0] sm:$0xff]
    %v217 = vld [vmem:[%s5 + $0xf8] sm:$0xff]
    %v218 = vld [vmem:[%s6] sm:$0xf]
    %v220 = vlaneseq
    %v221 = vshrl.u32 %v220, 7
    %v222 = vsub.s32 0, %v221
    %v223 = vrot.slane %v218, %v222
    %v224 = vlaneseq
    %v225 = vshrl.u32 %v224, 7
    %v226 = vsub.s32 1, %v225
    %v227 = vrot.slane %v218, %v226
    %v228 = vlaneseq
    %v229 = vshrl.u32 %v228, 7
    %v230 = vsub.s32 2, %v229
    %v231 = vrot.slane %v218, %v230
    %v232 = vlaneseq
    %v233 = vshrl.u32 %v232, 7
    %v234 = vsub.s32 3, %v233
    %v235 = vrot.slane %v218, %v234
    %v272 = vunpack.c.l.b16 %v186
    %v273 = vunpack.c.h.b16 %v186
    %v274 = vunpack.c.l.b16 %v187
    %v275 = vunpack.c.h.b16 %v187
    %v276 = vunpack.c.l.b16 %v188
    %v277 = vunpack.c.h.b16 %v188
    %v278 = vunpack.c.l.b16 %v189
    %v279 = vunpack.c.h.b16 %v189
    %v280 = vunpack.c.l.b16 %v190
    %v281 = vunpack.c.h.b16 %v190
    %v282 = vunpack.c.l.b16 %v191
    %v283 = vunpack.c.h.b16 %v191
    %v284 = vunpack.c.l.b16 %v192
    %v285 = vunpack.c.h.b16 %v192
    %v286 = vunpack.c.l.b16 %v193
    %v287 = vunpack.c.h.b16 %v193
    %v288 = vunpack.c.l.b16 %v194
    %v289 = vunpack.c.h.b16 %v194
    %v290 = vunpack.c.l.b16 %v195
    %v291 = vunpack.c.h.b16 %v195
    %v292 = vunpack.c.l.b16 %v196
    %v293 = vunpack.c.h.b16 %v196
    %v294 = vunpack.c.l.b16 %v197
    %v295 = vunpack.c.h.b16 %v197
    %v296 = vunpack.c.l.b16 %v198
    %v297 = vunpack.c.h.b16 %v198
    %v298 = vunpack.c.l.b16 %v199
    %v299 = vunpack.c.h.b16 %v199
    %v300 = vunpack.c.l.b16 %v200
    %v301 = vunpack.c.h.b16 %v200
    %v302 = vunpack.c.l.b16 %v201
    %v303 = vunpack.c.h.b16 %v201
    %v304 = vunpack.c.l.b16 %v202
    %v305 = vunpack.c.h.b16 %v202
    %v306 = vunpack.c.l.b16 %v203
    %v307 = vunpack.c.h.b16 %v203
    %v308 = vunpack.c.l.b16 %v204
    %v309 = vunpack.c.h.b16 %v204
    %v310 = vunpack.c.l.b16 %v205
    %v311 = vunpack.c.h.b16 %v205
    %v312 = vunpack.c.l.b16 %v206
    %v313 = vunpack.c.h.b16 %v206
    %v314 = vunpack.c.l.b16 %v207
    %v315 = vunpack.c.h.b16 %v207
    %v316 = vunpack.c.l.b16 %v208
    %v317 = vunpack.c.h.b16 %v208
    %v318 = vunpack.c.l.b16 %v209
    %v319 = vunpack.c.h.b16 %v209
    %v320 = vunpack.c.l.b16 %v210
    %v321 = vunpack.c.h.b16 %v210
    %v322 = vunpack.c.l.b16 %v211
    %v323 = vunpack.c.h.b16 %v211
    %v324 = vunpack.c.l.b16 %v212
    %v325 = vunpack.c.h.b16 %v212
    %v326 = vunpack.c.l.b16 %v213
    %v327 = vunpack.c.h.b16 %v213
    %v328 = vunpack.c.l.b16 %v214
    %v329 = vunpack.c.h.b16 %v214
    %v330 = vunpack.c.l.b16 %v215
    %v331 = vunpack.c.h.b16 %v215
    %v332 = vunpack.c.l.b16 %v216
    %v333 = vunpack.c.h.b16 %v216
    %v334 = vunpack.c.l.b16 %v217
    %v335 = vunpack.c.h.b16 %v217
    %v336 = vpack.c.b16 %v276, %v272
    %v337 = vpack.c.b16 %v277, %v273
    %v338 = vpack.c.b16 %v278, %v274
    %v339 = vpack.c.b16 %v279, %v275
    %v340 = vpack.c.b16 %v284, %v280
    %v341 = vpack.c.b16 %v285, %v281
    %v342 = vpack.c.b16 %v286, %v282
    %v343 = vpack.c.b16 %v287, %v283
    %v344 = vpack.c.b16 %v292, %v288
    %v345 = vpack.c.b16 %v293, %v289
    %v346 = vpack.c.b16 %v294, %v290
    %v347 = vpack.c.b16 %v295, %v291
    %v348 = vpack.c.b16 %v300, %v296
    %v349 = vpack.c.b16 %v301, %v297
    %v350 = vpack.c.b16 %v302, %v298
    %v351 = vpack.c.b16 %v303, %v299
    %v352 = vpack.c.b16 %v308, %v304
    %v353 = vpack.c.b16 %v309, %v305
    %v354 = vpack.c.b16 %v310, %v306
    %v355 = vpack.c.b16 %v311, %v307
    %v356 = vpack.c.b16 %v316, %v312
    %v357 = vpack.c.b16 %v317, %v313
    %v358 = vpack.c.b16 %v318, %v314
    %v359 = vpack.c.b16 %v319, %v315
    %v360 = vpack.c.b16 %v324, %v320
    %v361 = vpack.c.b16 %v325, %v321
    %v362 = vpack.c.b16 %v326, %v322
    %v363 = vpack.c.b16 %v327, %v323
    %v364 = vpack.c.b16 %v332, %v328
    %v365 = vpack.c.b16 %v333, %v329
    %v366 = vpack.c.b16 %v334, %v330
    %v367 = vpack.c.b16 %v335, %v331
    %400 = vmatprep.subr.bf16.mxu0 %v337
    %401 = vmatpush1.bf16.msra.mxu0 %v336
    %402 = vmatprep.subr.bf16.mxu0 %v341
    %403 = vmatpush1.bf16.msra.mxu0 %v340
    %404 = vmatprep.subr.bf16.mxu0 %v345
    %405 = vmatpush1.bf16.msra.mxu0 %v344
    %406 = vmatprep.subr.bf16.mxu0 %v349
    %407 = vmatpush1.bf16.msra.mxu0 %v348
    %408 = vmatprep.subr.bf16.mxu0 %v353
    %409 = vmatpush1.bf16.msra.mxu0 %v352
    %410 = vmatprep.subr.bf16.mxu0 %v357
    %411 = vmatpush1.bf16.msra.mxu0 %v356
    %412 = vmatprep.subr.bf16.mxu0 %v361
    %413 = vmatpush1.bf16.msra.mxu0 %v360
    %414 = vmatprep.subr.bf16.mxu0 %v365
    %415 = vmatpush1.bf16.msra.mxu0 %v364
    %416 = vmatprep.subr.bf16.mxu0 0
    %417 = vmatpush1.bf16.msra.mxu0 0
    %418 = vmatprep.subr.bf16.mxu0 0
    %419 = vmatpush1.bf16.msra.mxu0 0
    %420 = vmatprep.subr.bf16.mxu0 0
    %421 = vmatpush1.bf16.msra.mxu0 0
    %422 = vmatprep.subr.bf16.mxu0 0
    %423 = vmatpush1.bf16.msra.mxu0 0
    %424 = vmatprep.subr.bf16.mxu0 0
    %425 = vmatpush1.bf16.msra.mxu0 0
    %426 = vmatprep.subr.bf16.mxu0 0
    %427 = vmatpush1.bf16.msra.mxu0 0
    %428 = vmatprep.subr.bf16.mxu0 0
    %429 = vmatpush1.bf16.msra.mxu0 0
    %430 = vmatprep.subr.bf16.mxu0 0
    %431 = vmatpush1.bf16.msra.mxu0 0
    %432 = vmatprep.mubr.bf16.mxu0 0
    %433 = vmatmul.mubr.bf16.gmra.mrb[0].mxu0 %v185
    %v434 = vpop.f32.mrb[0].mxu0
    %v435 = vadd.f32 %v223, %v434
    %v436 = vpop.f32.mrb[0].mxu0
    %v437 = vadd.f32 %v227, %v436
    %v438 = vpop.f32.mrb[0].mxu0
    %v439 = vadd.f32 %v223, %v438
    %v440 = vpop.f32.mrb[0].mxu0
    %v441 = vadd.f32 %v227, %v440
    %442 = vdwg.mxu0
    %443 = vmatprep.subr.bf16.mxu0 %v339
    %444 = vmatpush1.bf16.msra.mxu0 %v338
    %445 = vmatprep.subr.bf16.mxu0 %v343
    %446 = vmatpush1.bf16.msra.mxu0 %v342
    %447 = vmatprep.subr.bf16.mxu0 %v347
    %448 = vmatpush1.bf16.msra.mxu0 %v346
    %449 = vmatprep.subr.bf16.mxu0 %v351
    %450 = vmatpush1.bf16.msra.mxu0 %v350
    %451 = vmatprep.subr.bf16.mxu0 %v355
    %452 = vmatpush1.bf16.msra.mxu0 %v354
    %453 = vmatprep.subr.bf16.mxu0 %v359
    %454 = vmatpush1.bf16.msra.mxu0 %v358
    %455 = vmatprep.subr.bf16.mxu0 %v363
    %456 = vmatpush1.bf16.msra.mxu0 %v362
    %457 = vmatprep.subr.bf16.mxu0 %v367
    %458 = vmatpush1.bf16.msra.mxu0 %v366
    %459 = vmatprep.subr.bf16.mxu0 0
    %460 = vmatpush1.bf16.msra.mxu0 0
    %461 = vmatprep.subr.bf16.mxu0 0
    %462 = vmatpush1.bf16.msra.mxu0 0
    %463 = vmatprep.subr.bf16.mxu0 0
    %464 = vmatpush1.bf16.msra.mxu0 0
    %465 = vmatprep.subr.bf16.mxu0 0
    %466 = vmatpush1.bf16.msra.mxu0 0
    %467 = vmatprep.subr.bf16.mxu0 0
    %468 = vmatpush1.bf16.msra.mxu0 0
    %469 = vmatprep.subr.bf16.mxu0 0
    %470 = vmatpush1.bf16.msra.mxu0 0
    %471 = vmatprep.subr.bf16.mxu0 0
    %472 = vmatpush1.bf16.msra.mxu0 0
    %473 = vmatprep.subr.bf16.mxu0 0
    %474 = vmatpush1.bf16.msra.mxu0 0
    %475 = vmatprep.mubr.bf16.mxu0 0
    %476 = vmatmul.mubr.bf16.gmra.mrb[0].mxu0 %v185
    %v477 = vpop.f32.mrb[0].mxu0
    %v478 = vadd.f32 %v231, %v477
    %v479 = vpop.f32.mrb[0].mxu0
    %v480 = vadd.f32 %v235, %v479
    %v481 = vpop.f32.mrb[0].mxu0
    %v482 = vadd.f32 %v231, %v481
    %v483 = vpop.f32.mrb[0].mxu0
    %v484 = vadd.f32 %v235, %v483
    %485 = vdwg.mxu0
    %486 = vst [vmem:[#allocation3] sm:$0xff] %v435
    %487 = vst [vmem:[#allocation3 + $0x8] sm:$0xff] %v437
    %488 = vst [vmem:[#allocation3 + $0x10] sm:$0xff] %v478
    %489 = vst [vmem:[#allocation3 + $0x18] sm:$0xff] %v480
    %490 = vst [vmem:[#allocation3 + $0x20] sm:$0xff] %v439
    %491 = vst [vmem:[#allocation3 + $0x28] sm:$0xff] %v441
    %492 = vst [vmem:[#allocation3 + $0x30] sm:$0xff] %v482
    %493 = vst [vmem:[#allocation3 + $0x38] sm:$0xff] %v484
    // Predicated region
    $region34: #{bert_only_mlm_head.1} parent=1 // pred_check
      _
    $region35: #{bert_only_mlm_head.1} parent=1 // pred_check_branch
      %495 = sbr.rel (0) target = $region37
    $region36: #{bert_only_mlm_head.1} parent=1 // pred_region
      %s497 = ssub.s32 1024, 1024
      %498 = vsyncadd [#allocation4], %s497
      %s499 = sshll.u32 [#allocation3], 4
      %s500 = int_to_ptr.vmem [resolvable:$true] %s499
      %505 = dma.vmem_to_hbm [thread:$0]  %s500, 1024, %s7, [#allocation4], 512, 512, 32
    $region37: #{bert_only_mlm_head.1} parent=1 // pred_fallthru
      _
    // Predicated region
    $region38: #{bert_only_mlm_head.1} parent=1 // pred_check
      _
    $region39: #{bert_only_mlm_head.1} parent=1 // pred_check_branch
      %507 = sbr.rel (0) target = $region41
    $region40: #{bert_only_mlm_head.1} parent=1 // pred_region
      %508 = dma.done [#allocation4], 1024
    $region41: #{bert_only_mlm_head.1} parent=1 // pred_fallthru
      _
    %509 = vsyncpa [#allocation4], 1

</llo_original>
